<compile_context>
chip_gen: v5e
topology: v5e:2x2
jax: 0.10.0
libtpu: 0.0.40
codegen_flags: <defaults>
</compile_context>

<pallas_src>
from functools import partial

import jax
import jax.numpy as jnp
from jax.experimental import pallas as pl
from jax.experimental.pallas import tpu as pltpu


def _concat_kernel(*refs):
    """refs = (*input_refs, out_ref).

    Builds the whole output row-slab in registers and writes it with a single
    lane-dense store (output width is the full concatenated feature dim).
    """
    in_refs = refs[:-1]
    o_ref = refs[-1]
    o_ref[...] = jnp.concatenate([r[...] for r in in_refs], axis=1)


def concat_input(feats, feature_names, *, block_rows=None):
    """Pallas equivalent of ConcatInput.forward.

    feats: dict name -> jnp.ndarray of shape [B, D_i] (same B for all).
    feature_names: ordering of the concat (torch.cat(..., dim=1)).
    block_rows: optional override of the batch tile size (mainly for testing).
    """
    xs = [jnp.asarray(feats[name]) for name in feature_names]

    # --- shape / dtype validation (torch.cat would error on mismatched B) ---
    B = xs[0].shape[0]
    for name, x in zip(feature_names, xs):
        if x.ndim != 2 or x.shape[0] != B:
            raise ValueError(
                f"feature {name!r} has shape {x.shape}, expected ({B}, D)")
    out_dtype = jnp.result_type(*[x.dtype for x in xs])
    xs = [x.astype(out_dtype) for x in xs]

    dims = tuple(int(x.shape[1]) for x in xs)
    total = sum(dims)
    itemsize = jnp.dtype(out_dtype).itemsize

    # --- batch tile: sublane-aligned, VMEM-budgeted, capped at 1024 rows ----
    sublane = max(8, 32 // itemsize)          # 8 for f32, 16 for bf16, 32 for i8
    if block_rows is None:
        vmem_budget = 16 * 1024 * 1024        # ~16 MiB for 2x(inputs)+2x(output)
        per_row_bytes = 4 * total * itemsize  # double-buffered in + out per row
        tb = min(1024, max(sublane, vmem_budget // max(per_row_bytes, 1)))
        tb = max(sublane, (tb // sublane) * sublane)
    else:
        tb = max(sublane, (int(block_rows) // sublane) * sublane)
    if B <= tb:
        tb = B                                # full-extent block is always legal

    grid = (pl.cdiv(B, tb),)

    return pl.pallas_call(
        _concat_kernel,
        out_shape=jax.ShapeDtypeStruct((B, total), out_dtype),
        grid=grid,
        in_specs=[
            pl.BlockSpec((tb, d), lambda i: (i, 0)) for d in dims
        ],
        out_specs=pl.BlockSpec((tb, total), lambda i: (i, 0)),
        compiler_params=pltpu.CompilerParams(
            dimension_semantics=("parallel",),
            vmem_limit_bytes=32 * 1024 * 1024,
        ),
    )(*xs)


if __name__ == "__main__":
    key = jax.random.PRNGKey(0)
    feature_names = ["query_emb", "image_emb", "text_emb"]
    dims = {"query_emb": 32, "image_emb": 64, "text_emb": 32}

    # --- small test (single block, B == tile) ------------------------------
    B = 8
    feats = {}
    for name in feature_names:
        key, sub = jax.random.split(key)
        feats[name] = jax.random.normal(sub, (B, dims[name]), dtype=jnp.float32)

    out = concat_input(feats, feature_names)
    out = jax.block_until_ready(out)
    ref = jnp.concatenate([feats[n] for n in feature_names], axis=1)
    assert out.shape == (B, sum(dims.values())), out.shape
    assert jnp.allclose(out, ref), "mismatch vs jnp.concatenate reference (small)"

    # --- multi-block test: exercises grid > 1 and a partial last block -----
    B2 = 40
    feats2 = {}
    for name in feature_names:
        key, sub = jax.random.split(key)
        feats2[name] = jax.random.normal(sub, (B2, dims[name]), dtype=jnp.float32)

    out2 = concat_input(feats2, feature_names, block_rows=16)
    out2 = jax.block_until_ready(out2)
    ref2 = jnp.concatenate([feats2[n] for n in feature_names], axis=1)
    assert out2.shape == (B2, sum(dims.values())), out2.shape
    assert jnp.allclose(out2, ref2), "mismatch vs jnp.concatenate reference (tiled)"

    print("KERNEL_OK")
</pallas_src>

<mosaic_0001>
module attributes {stable_mosaic.version = 11 : i64} {
  func.func @_concat_kernel(%arg0: i32, %arg1: memref<8x32xf32, #tpu.memory_space<vmem>>, %arg2: memref<8x64xf32, #tpu.memory_space<vmem>>, %arg3: memref<8x32xf32, #tpu.memory_space<vmem>>, %arg4: memref<8x128xf32, #tpu.memory_space<vmem>>) attributes {dimension_semantics = [#tpu.dimension_semantics<parallel>], iteration_bounds = array<i64: 1>, scalar_prefetch = 0 : i64, scratch_operands = 0 : i64, tpu.core_type = #tpu.core_type<tc>, window_params = [{transform_indices = @transform_0, window_bounds = array<i64: 8, 32>}, {transform_indices = @transform_1, window_bounds = array<i64: 8, 64>}, {transform_indices = @transform_2, window_bounds = array<i64: 8, 32>}, {transform_indices = @transform_3, window_bounds = array<i64: 8, 128>}]} {
    %c0 = arith.constant 0 : index
    %c0_0 = arith.constant 0 : index
    %0 = vector.load %arg1[%c0, %c0_0] : memref<8x32xf32, #tpu.memory_space<vmem>>, vector<8x32xf32>
    %c0_1 = arith.constant 0 : index
    %c0_2 = arith.constant 0 : index
    %1 = vector.load %arg2[%c0_1, %c0_2] : memref<8x64xf32, #tpu.memory_space<vmem>>, vector<8x64xf32>
    %c0_3 = arith.constant 0 : index
    %c0_4 = arith.constant 0 : index
    %2 = vector.load %arg3[%c0_3, %c0_4] : memref<8x32xf32, #tpu.memory_space<vmem>>, vector<8x32xf32>
    %3 = tpu.concatenate %0, %1, %2 in 1 : vector<8x32xf32>, vector<8x64xf32>, vector<8x32xf32> -> vector<8x128xf32>
    %c0_5 = arith.constant 0 : index
    %c0_6 = arith.constant 0 : index
    %4 = vector.load %arg4[%c0_5, %c0_6] : memref<8x128xf32, #tpu.memory_space<vmem>>, vector<8x128xf32>
    tpu.vector_store %arg4[%c0_5, %c0_6], %3 {strides = array<i32>} : memref<8x128xf32, #tpu.memory_space<vmem>>, vector<8x128xf32>,
    return
  }
  func.func @transform_0(%arg0: i32) -> (i32, i32) {
    %c0_i32 = arith.constant 0 : i32
    %c0_i32_0 = arith.constant 0 : i32
    return %arg0, %c0_i32 : i32, i32
  }
  func.func @transform_1(%arg0: i32) -> (i32, i32) {
    %c0_i32 = arith.constant 0 : i32
    %c0_i32_0 = arith.constant 0 : i32
    return %arg0, %c0_i32 : i32, i32
  }
  func.func @transform_2(%arg0: i32) -> (i32, i32) {
    %c0_i32 = arith.constant 0 : i32
    %c0_i32_0 = arith.constant 0 : i32
    return %arg0, %c0_i32 : i32, i32
  }
  func.func @transform_3(%arg0: i32) -> (i32, i32) {
    %c0_i32 = arith.constant 0 : i32
    %c0_i32_0 = arith.constant 0 : i32
    return %arg0, %c0_i32 : i32, i32
  }
}

</mosaic_0001>

<llo_original>
// kernel: tpu_custom_call.1
$region0: #{tpu_custom_call.1}
  #allocation0 [shape = 'u32[]', space=smem, size = 0x4, offset = 0x4, fixed_abs, tag = 'smem constant byte address 0x4 - core index']
  #allocation1 [shape = 'u32[72,128]{1,0:T(1,128)}', space=vmem, size = 0x9000, scoped, tag = 'internal scratch']
  %s0 = inlined_call_operand.hbm [shape: f32[8,32], index: 0, kind: input, shape index: {}]
  %s1 = inlined_call_operand.hbm [shape: f32[8,64], index: 1, kind: input, shape index: {}]
  %s2 = inlined_call_operand.hbm [shape: f32[8,32], index: 2, kind: input, shape index: {}]
  %s3 = inlined_call_operand.hbm [shape: f32[8,128], index: 3, kind: output, shape index: {}]
  %s4 = sld [smem:[#allocation0]]
  $region34: #{tpu_custom_call.1} parent=0
    _
  %s6 = ssub.s32 1, %s4
  %s7 = scalar_select 0, %s6, %s4
  $region1: #{tpu_custom_call.1} parent=0
    #allocation2 [shape = 'u8[4096]{0}', space=vmem, size = 0x1000, scoped, tag = 'input window, operand 0, single buffered']
    #allocation3 [shape = 's32[1]{0}', space=sflag, size = 0x4, scoped, tag = 'scoped memory for tpu_custom_call.1']
    #allocation4 [shape = 's32[1]{0}', space=sflag, size = 0x4, scoped, tag = 'scoped memory for tpu_custom_call.1']
    #allocation5 [shape = 'u8[4096]{0}', space=vmem, size = 0x1000, scoped, tag = 'input window, operand 1, single buffered']
    #allocation6 [shape = 's32[1]{0}', space=sflag, size = 0x4, scoped, tag = 'scoped memory for tpu_custom_call.1']
    #allocation7 [shape = 'u8[4096]{0}', space=vmem, size = 0x1000, scoped, tag = 'input window, operand 2, single buffered']
    #allocation8 [shape = 'u8[4096]{0}', space=vmem, size = 0x1000, scoped, tag = 'output window, operand 0, single buffered']
    %8 = vsyncpa [#allocation3], 0
    %9 = vsyncpa [#allocation6], 0
    %10 = vsyncpa [#allocation4], 0
    // Predicated region
    $region2: #{tpu_custom_call.1} parent=1 // pred_check
      _
    $region3: #{tpu_custom_call.1} parent=1 // pred_check_branch
      %12 = sbr.rel (0) target = $region5
    $region4: #{tpu_custom_call.1} parent=1 // pred_region
      %14 = vsyncadd [#allocation3], 0
      %s16 = sshll.u32 %s0, 4
      %s17 = int_to_ptr.hbm [resolvable:$true] %s16
      %s18 = sshll.u32 [#allocation2], 4
      %s19 = int_to_ptr.vmem [resolvable:$true] %s18
      %21 = dma.hbm_to_vmem [thread:$0]  %s17, 128, %s19, [#allocation3]
    $region5: #{tpu_custom_call.1} parent=1 // pred_fallthru
      _
    // Predicated region
    $region6: #{tpu_custom_call.1} parent=1 // pred_check
      _
    $region7: #{tpu_custom_call.1} parent=1 // pred_check_branch
      %23 = sbr.rel (0) target = $region9
    $region8: #{tpu_custom_call.1} parent=1 // pred_region
      %25 = vsyncadd [#allocation6], 0
      %s27 = sshll.u32 %s1, 4
      %s28 = int_to_ptr.hbm [resolvable:$true] %s27
      %s29 = sshll.u32 [#allocation5], 4
      %s30 = int_to_ptr.vmem [resolvable:$true] %s29
      %32 = dma.hbm_to_vmem [thread:$0]  %s28, 128, %s30, [#allocation6]
    $region9: #{tpu_custom_call.1} parent=1 // pred_fallthru
      _
    // Predicated region
    $region10: #{tpu_custom_call.1} parent=1 // pred_check
      _
    $region11: #{tpu_custom_call.1} parent=1 // pred_check_branch
      %34 = sbr.rel (0) target = $region13
    $region12: #{tpu_custom_call.1} parent=1 // pred_region
      %36 = vsyncadd [#allocation6], 0
      %s38 = sshll.u32 %s2, 4
      %s39 = int_to_ptr.hbm [resolvable:$true] %s38
      %s40 = sshll.u32 [#allocation7], 4
      %s41 = int_to_ptr.vmem [resolvable:$true] %s40
      %43 = dma.hbm_to_vmem [thread:$0]  %s39, 128, %s41, [#allocation6]
    $region13: #{tpu_custom_call.1} parent=1 // pred_fallthru
      _
    // Predicated region
    $region14: #{tpu_custom_call.1} parent=1 // pred_check
      _
    $region15: #{tpu_custom_call.1} parent=1 // pred_check_branch
      %45 = sbr.rel (0) target = $region17
    $region16: #{tpu_custom_call.1} parent=1 // pred_region
      %47 = dma.done [#allocation3], 128
    $region17: #{tpu_custom_call.1} parent=1 // pred_fallthru
      _
    // Predicated region
    $region18: #{tpu_custom_call.1} parent=1 // pred_check
      _
    $region19: #{tpu_custom_call.1} parent=1 // pred_check_branch
      %49 = sbr.rel (0) target = $region21
    $region20: #{tpu_custom_call.1} parent=1 // pred_region
      %51 = dma.done [#allocation6], 128
    $region21: #{tpu_custom_call.1} parent=1 // pred_fallthru
      _
    // Predicated region
    $region22: #{tpu_custom_call.1} parent=1 // pred_check
      _
    $region23: #{tpu_custom_call.1} parent=1 // pred_check_branch
      %53 = sbr.rel (0) target = $region25
    $region24: #{tpu_custom_call.1} parent=1 // pred_region
      %55 = dma.done [#allocation6], 128
    $region25: #{tpu_custom_call.1} parent=1 // pred_fallthru
      _
    %v56 = vld [vmem:[#allocation2] sm:$0xff]
    %v57 = vld [vmem:[#allocation5] sm:$0xff]
    %v58 = vld [vmem:[#allocation7] sm:$0xff]
    %60 = vrot.lane.b32.xlu0 %v57, 32
    %v61 = vpop.permute.xlu0 %60
    %64 = vrot.lane.b32.xlu0 %v58, 96
    %v65 = vpop.permute.xlu0 %64
    %vm67 = vcmask 261120
    %v68 = vsel %vm67, %v56, %v61
    %vm69 = vcmask 785408
    %v70 = vsel %vm69, %v68, %v65
    %71 = vst [vmem:[#allocation8] sm:$0xff] %v70
    // Predicated region
    $region26: #{tpu_custom_call.1} parent=1 // pred_check
      _
    $region27: #{tpu_custom_call.1} parent=1 // pred_check_branch
      %73 = sbr.rel (0) target = $region29
    $region28: #{tpu_custom_call.1} parent=1 // pred_region
      %75 = vsyncadd [#allocation4], 0
      %s77 = sshll.u32 [#allocation8], 4
      %s78 = int_to_ptr.vmem [resolvable:$true] %s77
      %s79 = sshll.u32 %s3, 4
      %s80 = int_to_ptr.hbm [resolvable:$true] %s79
      %82 = dma.vmem_to_hbm [thread:$0]  %s78, 128, %s80, [#allocation4]
    $region29: #{tpu_custom_call.1} parent=1 // pred_fallthru
      _
    // Predicated region
    $region30: #{tpu_custom_call.1} parent=1 // pred_check
      _
    $region31: #{tpu_custom_call.1} parent=1 // pred_check_branch
      %84 = sbr.rel (0) target = $region33
    $region32: #{tpu_custom_call.1} parent=1 // pred_region
      %86 = dma.done [#allocation4], 128
    $region33: #{tpu_custom_call.1} parent=1 // pred_fallthru
      _
    %87 = vsyncpa [#allocation3], 1
    %88 = vsyncpa [#allocation6], 1
    %89 = vsyncpa [#allocation4], 1

</llo_original>
